<compile_context>
chip_gen: v7x
topology: tpu7x:2x2x1
jax: 0.10.0
libtpu: 0.0.40
codegen_flags: <defaults>
</compile_context>

<pallas_src>
import functools

import jax
import jax.numpy as jnp
from jax import lax
from jax.experimental import pallas as pl
from jax.experimental.pallas import tpu as pltpu


def _fused_kernel(a_ref, b_ref, w_ref, g_ref, bt_ref, o_ref, *, eps):
    # a_ref / b_ref / o_ref: (N, c_blk, H, W) blocks (NCHW; H sublanes, W lanes)
    # w_ref:  (C*9,) f32 SMEM   -- flattened depthwise 3x3 weights (c, dh, dw)
    # g_ref / bt_ref: (C,) f32 SMEM -- BN affine params
    n, c_blk, h, w = a_ref.shape
    c0 = pl.program_id(0) * c_blk           # global channel offset of this block
    inv_cnt = 1.0 / float(n * h * w)

    # Boundary masks for the pad=1 taps (loop-invariant, hoisted out of the
    # per-channel loop; compares are cheap VPU ops).
    row = lax.broadcasted_iota(jnp.int32, (n, h, w), 1)
    col = lax.broadcasted_iota(jnp.int32, (n, h, w), 2)
    row_lo = row >= 1          # valid rows for dh = -1
    row_hi = row <= h - 2      # valid rows for dh = +1
    col_lo = col >= 1          # valid cols for dw = -1
    col_hi = col <= w - 2      # valid cols for dw = +1

    def channel_body(c, carry):
        cg = c0 + c            # global channel index (SMEM param lookup)
        wbase = cg * 9

        # (1) fused add, upcast to f32:  (N, H, W) slab for this channel.
        x = (a_ref[:, pl.ds(c, 1)][:, 0].astype(jnp.float32) +
             b_ref[:, pl.ds(c, 1)][:, 0].astype(jnp.float32))

        # (2) depthwise 3x3 conv (stride 1, pad 1): 8 XLU rolls + boundary
        # masks, 9 scalar-weighted FMAs (weights are SMEM scalars).
        acc = x * w_ref[wbase + 4]                      # centre tap (dh=dw=1)
        for dh in (-1, 0, 1):
            if dh == 0:
                xa = x
            else:
                mask_h = row_lo if dh == -1 else row_hi
                xa = jnp.where(mask_h, pltpu.roll(x, (-dh) % h, 1), 0.0)
            for dw in (-1, 0, 1):
                if dh == 0 and dw == 0:
                    continue                            # centre already done
                if dw == 0:
                    xab = xa
                else:
                    mask_w = col_lo if dw == -1 else col_hi
                    xab = jnp.where(mask_w, pltpu.roll(xa, (-dw) % w, 2), 0.0)
                acc = acc + xab * w_ref[wbase + (dh + 1) * 3 + (dw + 1)]

        # (3) BatchNorm2d (training-mode forward): two-pass per-channel stats
        # in f32 (mean, then centered variance -> no cancellation), affine.
        mean = jnp.sum(acc) * inv_cnt
        d = acc - mean
        var = jnp.sum(d * d) * inv_cnt
        scale = g_ref[cg] * lax.rsqrt(var + eps)
        y = d * scale + bt_ref[cg]
        o_ref[:, pl.ds(c, 1)] = y[:, None].astype(o_ref.dtype)
        return carry

    lax.fori_loop(0, c_blk, channel_body, 0)


def fused_add_dwconv_bn(x39, x27, weight, gamma, beta, eps=1e-3):
    """x39, x27: (N, C, H, W); weight: (C, 3, 3); gamma/beta: (C,)."""
    n, c, h, w = x39.shape
    assert x27.shape == x39.shape
    assert weight.shape == (c, 3, 3)

    # Channel blocking: 2 grid steps when C is even (both v7x TCs get work);
    # with W on lanes this costs nothing on single-TC v5e/v6e.
    nblk = 2 if (c % 2 == 0 and c >= 2) else 1
    cblk = c // nblk

    # Tiny per-channel params -> flat f32 arrays for SMEM (scalar reads).
    w_flat = weight.astype(jnp.float32).reshape(c * 9)
    g = gamma.astype(jnp.float32)
    bt = beta.astype(jnp.float32)

    io_spec = pl.BlockSpec((n, cblk, h, w), lambda i: (0, i, 0, 0))
    smem_spec = pl.BlockSpec(memory_space=pltpu.MemorySpace.SMEM)

    # Explicit scoped-VMEM budget: 3 blocked arrays x 2 pipeline buffers plus
    # headroom (defaults are 16/32 MiB; keep well under v7x's 64 MiB physical).
    blk_bytes = n * cblk * h * w * jnp.dtype(x39.dtype).itemsize
    vmem_limit = int(min(100 * 1024 * 1024,
                         max(8 * 1024 * 1024, 6 * blk_bytes + 4 * 1024 * 1024)))

    kernel = functools.partial(_fused_kernel, eps=eps)
    return pl.pallas_call(
        kernel,
        out_shape=jax.ShapeDtypeStruct((n, c, h, w), x39.dtype),
        grid=(nblk,),
        in_specs=[io_spec, io_spec, smem_spec, smem_spec, smem_spec],
        out_specs=io_spec,
        compiler_params=pltpu.CompilerParams(
            dimension_semantics=("parallel",),
            vmem_limit_bytes=vmem_limit),
    )(x39, x27, w_flat, g, bt)


def reference(x39, x27, weight, gamma, beta, eps=1e-3):
    """Pure-JAX reference matching the PyTorch module (training-mode BN)."""
    c = x39.shape[1]
    x = x39 + x27
    w = weight.reshape(c, 1, 3, 3)  # OIHW, depthwise
    y = jax.lax.conv_general_dilated(
        x, w, window_strides=(1, 1), padding=((1, 1), (1, 1)),
        dimension_numbers=("NCHW", "OIHW", "NCHW"), feature_group_count=c)
    mean = jnp.mean(y, axis=(0, 2, 3), keepdims=True)
    var = jnp.var(y, axis=(0, 2, 3), keepdims=True)   # biased
    g = gamma.reshape(1, c, 1, 1)
    b = beta.reshape(1, c, 1, 1)
    return g * (y - mean) / jnp.sqrt(var + eps) + b


if __name__ == "__main__":
    # Small shapes consistent with the module (depthwise conv: groups == C).
    N, C, H, W = 2, 4, 16, 16

    key = jax.random.PRNGKey(0)
    k1, k2, k3, k4, k5 = jax.random.split(key, 5)
    x39 = jax.random.normal(k1, (N, C, H, W), jnp.float32)
    x27 = jax.random.normal(k2, (N, C, H, W), jnp.float32)
    weight = jax.random.normal(k3, (C, 3, 3), jnp.float32) * 0.1
    gamma = jax.random.normal(k4, (C,), jnp.float32) * 0.1 + 1.0
    beta = jax.random.normal(k5, (C,), jnp.float32) * 0.1

    fused = jax.jit(functools.partial(fused_add_dwconv_bn, eps=1e-3))
    out = jax.block_until_ready(fused(x39, x27, weight, gamma, beta))

    ref = jax.block_until_ready(
        reference(x39, x27, weight, gamma, beta, eps=1e-3))
    assert out.shape == (N, C, H, W)
    max_err = float(jnp.max(jnp.abs(out - ref)))
    assert jnp.allclose(out, ref, atol=1e-4, rtol=1e-4), max_err

    print("KERNEL_OK")
</pallas_src>

<mosaic_0001>
module attributes {stable_mosaic.version = 11 : i64} {
  func.func @_fused_kernel(%arg0: i32, %arg1: memref<2x2x16x16xf32, #tpu.memory_space<vmem>>, %arg2: memref<2x2x16x16xf32, #tpu.memory_space<vmem>>, %arg3: memref<36xf32, #tpu.memory_space<smem>>, %arg4: memref<4xf32, #tpu.memory_space<smem>>, %arg5: memref<4xf32, #tpu.memory_space<smem>>, %arg6: memref<2x2x16x16xf32, #tpu.memory_space<vmem>>) attributes {dimension_semantics = [#tpu.dimension_semantics<parallel>], iteration_bounds = array<i64: 2>, scalar_prefetch = 0 : i64, scratch_operands = 0 : i64, tpu.core_type = #tpu.core_type<tc>, window_params = [{transform_indices = @transform_0, window_bounds = array<i64: 2, 2, 16, 16>}, {transform_indices = @transform_1, window_bounds = array<i64: 2, 2, 16, 16>}, {transform_indices = @transform_2, window_bounds = array<i64: 36>}, {transform_indices = @transform_3, window_bounds = array<i64: 4>}, {transform_indices = @transform_4, window_bounds = array<i64: 4>}, {transform_indices = @transform_5, window_bounds = array<i64: 2, 2, 16, 16>}]} {
    %c2_i32 = arith.constant 2 : i32
    %0 = arith.muli %arg0, %c2_i32 : i32
    %1 = tpu.iota {dimensions = array<i32: 1>} : vector<2x16x16xi32>
    %2 = tpu.iota {dimensions = array<i32: 2>} : vector<2x16x16xi32>
    %c1_i32 = arith.constant 1 : i32
    %3 = vector.broadcast %c1_i32 : i32 to vector<2x16x16xi32>
    %4 = arith.cmpi sge, %1, %3 : vector<2x16x16xi32>
    %c14_i32 = arith.constant 14 : i32
    %5 = vector.broadcast %c14_i32 : i32 to vector<2x16x16xi32>
    %6 = arith.cmpi sle, %1, %5 : vector<2x16x16xi32>
    %c1_i32_0 = arith.constant 1 : i32
    %7 = vector.broadcast %c1_i32_0 : i32 to vector<2x16x16xi32>
    %8 = arith.cmpi sge, %2, %7 : vector<2x16x16xi32>
    %c14_i32_1 = arith.constant 14 : i32
    %9 = vector.broadcast %c14_i32_1 : i32 to vector<2x16x16xi32>
    %10 = arith.cmpi sle, %2, %9 : vector<2x16x16xi32>
    %c0_i32 = arith.constant 0 : i32
    %c2_i32_2 = arith.constant 2 : i32
    %11 = arith.addi %c0_i32, %c2_i32_2 : i32
    %c1_i32_3 = arith.constant 1 : i32
    scf.for %arg7 = %c0_i32 to %11 step %c1_i32_3  : i32 {
      %12 = arith.addi %0, %arg7 : i32
      %c9_i32 = arith.constant 9 : i32
      %13 = arith.muli %12, %c9_i32 : i32
      %c0 = arith.constant 0 : index
      %14 = arith.index_cast %arg7 : i32 to index
      %c0_5 = arith.constant 0 : index
      %c0_6 = arith.constant 0 : index
      %15 = vector.load %arg1[%c0, %14, %c0_5, %c0_6] : memref<2x2x16x16xf32, #tpu.memory_space<vmem>>, vector<2x1x16x16xf32>
      %16 = vector.shape_cast %15 : vector<2x1x16x16xf32> to vector<2x16x16xf32>
      %c0_7 = arith.constant 0 : index
      %17 = arith.index_cast %arg7 : i32 to index
      %c0_8 = arith.constant 0 : index
      %c0_9 = arith.constant 0 : index
      %18 = vector.load %arg2[%c0_7, %17, %c0_8, %c0_9] : memref<2x2x16x16xf32, #tpu.memory_space<vmem>>, vector<2x1x16x16xf32>
      %19 = vector.shape_cast %18 : vector<2x1x16x16xf32> to vector<2x16x16xf32>
      %20 = arith.addf %16, %19 : vector<2x16x16xf32>
      %c4_i32 = arith.constant 4 : i32
      %21 = arith.addi %13, %c4_i32 : i32
      %22 = arith.index_cast %21 : i32 to index
      %23 = memref.load %arg3[%22] : memref<36xf32, #tpu.memory_space<smem>>
      %24 = vector.broadcast %23 : f32 to vector<2x16x16xf32>
      %25 = arith.mulf %20, %24 : vector<2x16x16xf32>
      %c1_i32_10 = arith.constant 1 : i32
      %26 = tpu.dynamic_rotate %20 by %c1_i32_10 dim 1 : vector<2x16x16xf32>, i32 -> vector<2x16x16xf32>
      %cst = arith.constant 0.000000e+00 : f32
      %27 = vector.broadcast %cst : f32 to vector<2x16x16xf32>
      %28 = arith.select %4, %26, %27 : vector<2x16x16xi1>, vector<2x16x16xf32>
      %c1_i32_11 = arith.constant 1 : i32
      %29 = tpu.dynamic_rotate %28 by %c1_i32_11 dim 2 : vector<2x16x16xf32>, i32 -> vector<2x16x16xf32>
      %cst_12 = arith.constant 0.000000e+00 : f32
      %30 = vector.broadcast %cst_12 : f32 to vector<2x16x16xf32>
      %31 = arith.select %8, %29, %30 : vector<2x16x16xi1>, vector<2x16x16xf32>
      %c0_i32_13 = arith.constant 0 : i32
      %32 = arith.addi %13, %c0_i32_13 : i32
      %c0_i32_14 = arith.constant 0 : i32
      %33 = arith.addi %32, %c0_i32_14 : i32
      %34 = arith.index_cast %33 : i32 to index
      %35 = memref.load %arg3[%34] : memref<36xf32, #tpu.memory_space<smem>>
      %36 = vector.broadcast %35 : f32 to vector<2x16x16xf32>
      %37 = arith.mulf %31, %36 : vector<2x16x16xf32>
      %38 = arith.addf %25, %37 : vector<2x16x16xf32>
      %c0_i32_15 = arith.constant 0 : i32
      %39 = arith.addi %13, %c0_i32_15 : i32
      %c1_i32_16 = arith.constant 1 : i32
      %40 = arith.addi %39, %c1_i32_16 : i32
      %41 = arith.index_cast %40 : i32 to index
      %42 = memref.load %arg3[%41] : memref<36xf32, #tpu.memory_space<smem>>
      %43 = vector.broadcast %42 : f32 to vector<2x16x16xf32>
      %44 = arith.mulf %28, %43 : vector<2x16x16xf32>
      %45 = arith.addf %38, %44 : vector<2x16x16xf32>
      %c15_i32 = arith.constant 15 : i32
      %46 = tpu.dynamic_rotate %28 by %c15_i32 dim 2 : vector<2x16x16xf32>, i32 -> vector<2x16x16xf32>
      %cst_17 = arith.constant 0.000000e+00 : f32
      %47 = vector.broadcast %cst_17 : f32 to vector<2x16x16xf32>
      %48 = arith.select %10, %46, %47 : vector<2x16x16xi1>, vector<2x16x16xf32>
      %c0_i32_18 = arith.constant 0 : i32
      %49 = arith.addi %13, %c0_i32_18 : i32
      %c2_i32_19 = arith.constant 2 : i32
      %50 = arith.addi %49, %c2_i32_19 : i32
      %51 = arith.index_cast %50 : i32 to index
      %52 = memref.load %arg3[%51] : memref<36xf32, #tpu.memory_space<smem>>
      %53 = vector.broadcast %52 : f32 to vector<2x16x16xf32>
      %54 = arith.mulf %48, %53 : vector<2x16x16xf32>
      %55 = arith.addf %45, %54 : vector<2x16x16xf32>
      %c1_i32_20 = arith.constant 1 : i32
      %56 = tpu.dynamic_rotate %20 by %c1_i32_20 dim 2 : vector<2x16x16xf32>, i32 -> vector<2x16x16xf32>
      %cst_21 = arith.constant 0.000000e+00 : f32
      %57 = vector.broadcast %cst_21 : f32 to vector<2x16x16xf32>
      %58 = arith.select %8, %56, %57 : vector<2x16x16xi1>, vector<2x16x16xf32>
      %c3_i32 = arith.constant 3 : i32
      %59 = arith.addi %13, %c3_i32 : i32
      %c0_i32_22 = arith.constant 0 : i32
      %60 = arith.addi %59, %c0_i32_22 : i32
      %61 = arith.index_cast %60 : i32 to index
      %62 = memref.load %arg3[%61] : memref<36xf32, #tpu.memory_space<smem>>
      %63 = vector.broadcast %62 : f32 to vector<2x16x16xf32>
      %64 = arith.mulf %58, %63 : vector<2x16x16xf32>
      %65 = arith.addf %55, %64 : vector<2x16x16xf32>
      %c15_i32_23 = arith.constant 15 : i32
      %66 = tpu.dynamic_rotate %20 by %c15_i32_23 dim 2 : vector<2x16x16xf32>, i32 -> vector<2x16x16xf32>
      %cst_24 = arith.constant 0.000000e+00 : f32
      %67 = vector.broadcast %cst_24 : f32 to vector<2x16x16xf32>
      %68 = arith.select %10, %66, %67 : vector<2x16x16xi1>, vector<2x16x16xf32>
      %c3_i32_25 = arith.constant 3 : i32
      %69 = arith.addi %13, %c3_i32_25 : i32
      %c2_i32_26 = arith.constant 2 : i32
      %70 = arith.addi %69, %c2_i32_26 : i32
      %71 = arith.index_cast %70 : i32 to index
      %72 = memref.load %arg3[%71] : memref<36xf32, #tpu.memory_space<smem>>
      %73 = vector.broadcast %72 : f32 to vector<2x16x16xf32>
      %74 = arith.mulf %68, %73 : vector<2x16x16xf32>
      %75 = arith.addf %65, %74 : vector<2x16x16xf32>
      %c15_i32_27 = arith.constant 15 : i32
      %76 = tpu.dynamic_rotate %20 by %c15_i32_27 dim 1 : vector<2x16x16xf32>, i32 -> vector<2x16x16xf32>
      %cst_28 = arith.constant 0.000000e+00 : f32
      %77 = vector.broadcast %cst_28 : f32 to vector<2x16x16xf32>
      %78 = arith.select %6, %76, %77 : vector<2x16x16xi1>, vector<2x16x16xf32>
      %c1_i32_29 = arith.constant 1 : i32
      %79 = tpu.dynamic_rotate %78 by %c1_i32_29 dim 2 : vector<2x16x16xf32>, i32 -> vector<2x16x16xf32>
      %cst_30 = arith.constant 0.000000e+00 : f32
      %80 = vector.broadcast %cst_30 : f32 to vector<2x16x16xf32>
      %81 = arith.select %8, %79, %80 : vector<2x16x16xi1>, vector<2x16x16xf32>
      %c6_i32 = arith.constant 6 : i32
      %82 = arith.addi %13, %c6_i32 : i32
      %c0_i32_31 = arith.constant 0 : i32
      %83 = arith.addi %82, %c0_i32_31 : i32
      %84 = arith.index_cast %83 : i32 to index
      %85 = memref.load %arg3[%84] : memref<36xf32, #tpu.memory_space<smem>>
      %86 = vector.broadcast %85 : f32 to vector<2x16x16xf32>
      %87 = arith.mulf %81, %86 : vector<2x16x16xf32>
      %88 = arith.addf %75, %87 : vector<2x16x16xf32>
      %c6_i32_32 = arith.constant 6 : i32
      %89 = arith.addi %13, %c6_i32_32 : i32
      %c1_i32_33 = arith.constant 1 : i32
      %90 = arith.addi %89, %c1_i32_33 : i32
      %91 = arith.index_cast %90 : i32 to index
      %92 = memref.load %arg3[%91] : memref<36xf32, #tpu.memory_space<smem>>
      %93 = vector.broadcast %92 : f32 to vector<2x16x16xf32>
      %94 = arith.mulf %78, %93 : vector<2x16x16xf32>
      %95 = arith.addf %88, %94 : vector<2x16x16xf32>
      %c15_i32_34 = arith.constant 15 : i32
      %96 = tpu.dynamic_rotate %78 by %c15_i32_34 dim 2 : vector<2x16x16xf32>, i32 -> vector<2x16x16xf32>
      %cst_35 = arith.constant 0.000000e+00 : f32
      %97 = vector.broadcast %cst_35 : f32 to vector<2x16x16xf32>
      %98 = arith.select %10, %96, %97 : vector<2x16x16xi1>, vector<2x16x16xf32>
      %c6_i32_36 = arith.constant 6 : i32
      %99 = arith.addi %13, %c6_i32_36 : i32
      %c2_i32_37 = arith.constant 2 : i32
      %100 = arith.addi %99, %c2_i32_37 : i32
      %101 = arith.index_cast %100 : i32 to index
      %102 = memref.load %arg3[%101] : memref<36xf32, #tpu.memory_space<smem>>
      %103 = vector.broadcast %102 : f32 to vector<2x16x16xf32>
      %104 = arith.mulf %98, %103 : vector<2x16x16xf32>
      %105 = arith.addf %95, %104 : vector<2x16x16xf32>
      %106 = vector.shape_cast %105 : vector<2x16x16xf32> to vector<1x2x16x16xf32>
      %cst_38 = arith.constant dense<0.000000e+00> : vector<1xf32>
      %107 = vector.multi_reduction <add>, %106, %cst_38 [1, 2, 3] : vector<1x2x16x16xf32> to vector<1xf32>
      %108 = vector.shape_cast %107 : vector<1xf32> to vector<1x1x1x1xf32>
      %109 = vector.extract %108[0, 0, 0, 0] : f32 from vector<1x1x1x1xf32>
      %cst_39 = arith.constant 0.001953125 : f32
      %110 = arith.mulf %109, %cst_39 : f32
      %111 = vector.broadcast %110 : f32 to vector<2x16x16xf32>
      %112 = arith.subf %105, %111 : vector<2x16x16xf32>
      %113 = arith.mulf %112, %112 : vector<2x16x16xf32>
      %114 = vector.shape_cast %113 : vector<2x16x16xf32> to vector<1x2x16x16xf32>
      %cst_40 = arith.constant dense<0.000000e+00> : vector<1xf32>
      %115 = vector.multi_reduction <add>, %114, %cst_40 [1, 2, 3] : vector<1x2x16x16xf32> to vector<1xf32>
      %116 = vector.shape_cast %115 : vector<1xf32> to vector<1x1x1x1xf32>
      %117 = vector.extract %116[0, 0, 0, 0] : f32 from vector<1x1x1x1xf32>
      %cst_41 = arith.constant 0.001953125 : f32
      %118 = arith.mulf %117, %cst_41 : f32
      %119 = arith.index_cast %12 : i32 to index
      %120 = memref.load %arg4[%119] : memref<4xf32, #tpu.memory_space<smem>>
      %cst_42 = arith.constant 1.000000e-03 : f32
      %121 = arith.addf %118, %cst_42 : f32
      %122 = math.rsqrt %121 : f32
      %123 = arith.mulf %120, %122 : f32
      %124 = vector.broadcast %123 : f32 to vector<2x16x16xf32>
      %125 = arith.mulf %112, %124 : vector<2x16x16xf32>
      %126 = arith.index_cast %12 : i32 to index
      %127 = memref.load %arg5[%126] : memref<4xf32, #tpu.memory_space<smem>>
      %128 = vector.broadcast %127 : f32 to vector<2x16x16xf32>
      %129 = arith.addf %125, %128 : vector<2x16x16xf32>
      %130 = vector.shape_cast %129 : vector<2x16x16xf32> to vector<2x1x16x16xf32>
      %c0_43 = arith.constant 0 : index
      %131 = arith.index_cast %arg7 : i32 to index
      %c0_44 = arith.constant 0 : index
      %c0_45 = arith.constant 0 : index
      %132 = vector.load %arg6[%c0_43, %131, %c0_44, %c0_45] : memref<2x2x16x16xf32, #tpu.memory_space<vmem>>, vector<2x1x16x16xf32>
      tpu.vector_store %arg6[%c0_43, %131, %c0_44, %c0_45], %130 {strides = array<i32>} : memref<2x2x16x16xf32, #tpu.memory_space<vmem>>, vector<2x1x16x16xf32>,
    }
    %c2_i32_4 = arith.constant 2 : i32
    return
  }
  func.func @transform_0(%arg0: i32) -> (i32, i32, i32, i32) {
    %c0_i32 = arith.constant 0 : i32
    %c0_i32_0 = arith.constant 0 : i32
    %c0_i32_1 = arith.constant 0 : i32
    %c0_i32_2 = arith.constant 0 : i32
    return %c0_i32, %arg0, %c0_i32_0, %c0_i32_1 : i32, i32, i32, i32
  }
  func.func @transform_1(%arg0: i32) -> (i32, i32, i32, i32) {
    %c0_i32 = arith.constant 0 : i32
    %c0_i32_0 = arith.constant 0 : i32
    %c0_i32_1 = arith.constant 0 : i32
    %c0_i32_2 = arith.constant 0 : i32
    return %c0_i32, %arg0, %c0_i32_0, %c0_i32_1 : i32, i32, i32, i32
  }
  func.func @transform_2(%arg0: i32) -> i32 {
    %c0_i32 = arith.constant 0 : i32
    %c0_i32_0 = arith.constant 0 : i32
    return %c0_i32 : i32
  }
  func.func @transform_3(%arg0: i32) -> i32 {
    %c0_i32 = arith.constant 0 : i32
    %c0_i32_0 = arith.constant 0 : i32
    return %c0_i32 : i32
  }
  func.func @transform_4(%arg0: i32) -> i32 {
    %c0_i32 = arith.constant 0 : i32
    %c0_i32_0 = arith.constant 0 : i32
    return %c0_i32 : i32
  }
  func.func @transform_5(%arg0: i32) -> (i32, i32, i32, i32) {
    %c0_i32 = arith.constant 0 : i32
    %c0_i32_0 = arith.constant 0 : i32
    %c0_i32_1 = arith.constant 0 : i32
    %c0_i32_2 = arith.constant 0 : i32
    return %c0_i32, %arg0, %c0_i32_0, %c0_i32_1 : i32, i32, i32, i32
  }
}

</mosaic_0001>

<llo_original>
// kernel: fused_add_dwconv_bn.1
$region0: #{fused_add_dwconv_bn.1}
  #allocation0 [shape = 'u32[]', space=smem, size = 0x4, offset = 0x4, fixed_abs, tag = 'smem constant byte address 0x4 - core index']
  #allocation1 [shape = 'u32[144,128]{1,0:T(1,128)}', space=vmem, size = 0x12000, scoped, tag = 'internal scratch']
  #allocation13 [shape = 's32[]', space=sflag, size = 0x4, offset = 0, fixed_abs, tag = 'sflag constant byte address 0x0 - dummy sync flag']
  #allocation15 [shape = 's32[]', space=sflag, size = 0x4, offset = 0, fixed_abs, tag = 'sflag constant byte address 0x0 - dummy sync flag']
  #allocation17 [shape = 's32[]', space=sflag, size = 0x4, offset = 0, fixed_abs, tag = 'sflag constant byte address 0x0 - dummy sync flag']
  %s0 = inlined_call_operand.hbm [shape: f32[2,4,16,16], index: 0, kind: input, shape index: {}]
  %s1 = inlined_call_operand.hbm [shape: f32[2,4,16,16], index: 1, kind: input, shape index: {}]
  %s2 = inlined_call_operand.vmem [shape: f32[36], index: 2, kind: input, shape index: {}]
  %s3 = inlined_call_operand.vmem [shape: f32[4], index: 3, kind: input, shape index: {}]
  %s4 = inlined_call_operand.vmem [shape: f32[4], index: 4, kind: input, shape index: {}]
  %s5 = inlined_call_operand.hbm [shape: f32[2,4,16,16], index: 5, kind: output, shape index: {}]
  %s6 = sld [smem:[#allocation0]]
  $region80: #{fused_add_dwconv_bn.1} parent=0
    _
  %s8 = ssub.s32 1, %s6
  %s9 = scalar_select 0, %s8, %s6
  $region1: #{fused_add_dwconv_bn.1} parent=0
    #allocation2 [shape = 'u8[65536]{0}', space=vmem, size = 0x10000, scoped, tag = 'input window, operand 0']
    #allocation3 [shape = 's32[2]{0}', space=sflag, size = 0x8, scoped, tag = 'scoped memory for fused_add_dwconv_bn.1']
    #allocation4 [shape = 's32[2]{0}', space=sflag, size = 0x8, scoped, tag = 'scoped memory for fused_add_dwconv_bn.1']
    #allocation5 [shape = 's32[2]{0}', space=sflag, size = 0x8, scoped, tag = 'scoped memory for fused_add_dwconv_bn.1']
    #allocation6 [shape = 'u8[65536]{0}', space=vmem, size = 0x10000, scoped, tag = 'input window, operand 1']
    #allocation7 [shape = 's32[2]{0}', space=sflag, size = 0x8, scoped, tag = 'scoped memory for fused_add_dwconv_bn.1']
    #allocation8 [shape = 'u8[512]{0}', space=smem, size = 0x200, scoped, tag = 'input window, operand 2, single buffered']
    #allocation9 [shape = 'u8[512]{0}', space=smem, size = 0x200, scoped, tag = 'input window, operand 3, single buffered']
    #allocation10 [shape = 's32[1]{0}', space=sflag, size = 0x4, scoped, tag = 'scoped memory for fused_add_dwconv_bn.1']
    #allocation11 [shape = 'u8[512]{0}', space=smem, size = 0x200, scoped, tag = 'input window, operand 4, single buffered']
    #allocation12 [shape = 'u8[65536]{0}', space=vmem, size = 0x10000, scoped, tag = 'output window, operand 0']
    %10 = vsyncpa [#allocation3], 0
    %s11 = scalar_lea.sflag [#allocation3], 1
    %12 = vsyncpa %s11, 0
    %13 = vsyncpa [#allocation7], 0
    %s14 = scalar_lea.sflag [#allocation7], 1
    %15 = vsyncpa %s14, 0
    %16 = vsyncpa [#allocation5], 0
    %17 = vsyncpa [#allocation10], 0
    %18 = vsyncpa [#allocation4], 0
    %s19 = scalar_lea.sflag [#allocation4], 1
    %20 = vsyncpa %s19, 0
    loop: start=0, step=1, limit=4
    $region2: #{fused_add_dwconv_bn.1} parent=1 // loop_pre_header
      _
    $region3: #{fused_add_dwconv_bn.1} parent=1 // loop_header
      %s22 = sphi 0, %s26
      %p23 = scmp.ge.s32.totalorder %s22, 4
      %s32 = sphi 0, %s34
      %s35 = sphi 0, %s32
      %s36 = sphi 0, %s35
      %s52 = sphi 0, %s36
      %s58 = sphi 0, %s60
      %s61 = sphi 0, %s58
      %s62 = sphi 0, %s61
      %s78 = sphi 0, %s62
      %s82 = sphi 0, %s82
      %s84 = sphi 0, %s82
      %s85 = sphi 0, %s84
      %s99 = sphi 0, %s85
      %s103 = sphi 0, %s103
      %s105 = sphi 0, %s103
      %s106 = sphi 0, %s105
      %s120 = sphi 0, %s106
      %s124 = sphi 0, %s124
      %s126 = sphi 0, %s124
      %s127 = sphi 0, %s126
      %s141 = sphi 0, %s127
      %s147 = sphi 0, %s149
      %s150 = sphi 0, %s147
      %s151 = sphi 0, %s150
      %s167 = sphi 0, %s151
    $region4: #{fused_add_dwconv_bn.1} parent=1 // loop_header_branch
      %25 = sbr.rel (%p23) target = $region8
    $region5: #{fused_add_dwconv_bn.1} parent=1 // loop_body
      %s27 = ssub.s32 %s22, 1
      %s28 = ssub.s32 %s22, 2
      %s29 = sadd.s32 %s22, 1
      %s30 = ssub.s32 %s22, %s29
      %p31 = scmp.eq.s32.totalorder %s30, 0
      %s33 = sadd.s32 %s32, 1
      %s34 = scalar_select %p31, %s32, %s33
      %p37 = pneg %p31
      %p38 = scmp.eq.s32.totalorder %s22, 1
      %p39 = por %p37, %p38
      %p40 = scmp.ne.s32.totalorder %s32, %s35
      %p41 = scmp.eq.s32.totalorder %s22, 0
      %p42 = por %p40, %p41
      %p43 = scmp.ne.s32.totalorder %s32, %s35
      %p44 = scmp.eq.s32.totalorder %s27, 1
      %p45 = por %p43, %p44
      %p46 = scmp.ne.s32.totalorder %s35, %s36
      %p47 = scmp.eq.s32.totalorder %s27, 0
      %p48 = por %p46, %p47
      %p49 = scmp.ne.s32.totalorder %s35, %s36
      %p50 = scmp.eq.s32.totalorder %s28, 1
      %p51 = por %p49, %p50
      %p53 = scmp.ne.s32.totalorder %s36, %s52
      %p54 = scmp.eq.s32.totalorder %s28, 0
      %p55 = por %p53, %p54
      %s56 = ssub.s32 %s22, %s29
      %p57 = scmp.eq.s32.totalorder %s56, 0
      %s59 = sadd.s32 %s58, 1
      %s60 = scalar_select %p57, %s58, %s59
      %p63 = pneg %p57
      %p64 = scmp.eq.s32.totalorder %s22, 1
      %p65 = por %p63, %p64
      %p66 = scmp.ne.s32.totalorder %s58, %s61
      %p67 = scmp.eq.s32.totalorder %s22, 0
      %p68 = por %p66, %p67
      %p69 = scmp.ne.s32.totalorder %s58, %s61
      %p70 = scmp.eq.s32.totalorder %s27, 1
      %p71 = por %p69, %p70
      %p72 = scmp.ne.s32.totalorder %s61, %s62
      %p73 = scmp.eq.s32.totalorder %s27, 0
      %p74 = por %p72, %p73
      %p75 = scmp.ne.s32.totalorder %s61, %s62
      %p76 = scmp.eq.s32.totalorder %s28, 1
      %p77 = por %p75, %p76
      %p79 = scmp.ne.s32.totalorder %s62, %s78
      %p80 = scmp.eq.s32.totalorder %s28, 0
      %p81 = por %p79, %p80
      %s83 = sadd.s32 %s82, 1
      %p86 = scmp.eq.s32.totalorder %s22, 1
      %p87 = scmp.ne.s32.totalorder %s82, %s84
      %p88 = scmp.eq.s32.totalorder %s22, 0
      %p89 = por %p87, %p88
      %p90 = scmp.ne.s32.totalorder %s82, %s84
      %p91 = scmp.eq.s32.totalorder %s27, 1
      %p92 = por %p90, %p91
      %p93 = scmp.ne.s32.totalorder %s84, %s85
      %p94 = scmp.eq.s32.totalorder %s27, 0
      %p95 = por %p93, %p94
      %p96 = scmp.ne.s32.totalorder %s84, %s85
      %p97 = scmp.eq.s32.totalorder %s28, 1
      %p98 = por %p96, %p97
      %p100 = scmp.ne.s32.totalorder %s85, %s99
      %p101 = scmp.eq.s32.totalorder %s28, 0
      %p102 = por %p100, %p101
      %s104 = sadd.s32 %s103, 1
      %p107 = scmp.eq.s32.totalorder %s22, 1
      %p108 = scmp.ne.s32.totalorder %s103, %s105
      %p109 = scmp.eq.s32.totalorder %s22, 0
      %p110 = por %p108, %p109
      %p111 = scmp.ne.s32.totalorder %s103, %s105
      %p112 = scmp.eq.s32.totalorder %s27, 1
      %p113 = por %p111, %p112
      %p114 = scmp.ne.s32.totalorder %s105, %s106
      %p115 = scmp.eq.s32.totalorder %s27, 0
      %p116 = por %p114, %p115
      %p117 = scmp.ne.s32.totalorder %s105, %s106
      %p118 = scmp.eq.s32.totalorder %s28, 1
      %p119 = por %p117, %p118
      %p121 = scmp.ne.s32.totalorder %s106, %s120
      %p122 = scmp.eq.s32.totalorder %s28, 0
      %p123 = por %p121, %p122
      %s125 = sadd.s32 %s124, 1
      %p128 = scmp.eq.s32.totalorder %s22, 1
      %p129 = scmp.ne.s32.totalorder %s124, %s126
      %p130 = scmp.eq.s32.totalorder %s22, 0
      %p131 = por %p129, %p130
      %p132 = scmp.ne.s32.totalorder %s124, %s126
      %p133 = scmp.eq.s32.totalorder %s27, 1
      %p134 = por %p132, %p133
      %p135 = scmp.ne.s32.totalorder %s126, %s127
      %p136 = scmp.eq.s32.totalorder %s27, 0
      %p137 = por %p135, %p136
      %p138 = scmp.ne.s32.totalorder %s126, %s127
      %p139 = scmp.eq.s32.totalorder %s28, 1
      %p140 = por %p138, %p139
      %p142 = scmp.ne.s32.totalorder %s127, %s141
      %p143 = scmp.eq.s32.totalorder %s28, 0
      %p144 = por %p142, %p143
      %s145 = ssub.s32 %s22, %s29
      %p146 = scmp.eq.s32.totalorder %s145, 0
      %s148 = sadd.s32 %s147, 1
      %s149 = scalar_select %p146, %s147, %s148
      %p152 = pneg %p146
      %p153 = scmp.eq.s32.totalorder %s22, 1
      %p154 = por %p152, %p153
      %p155 = scmp.ne.s32.totalorder %s147, %s150
      %p156 = scmp.eq.s32.totalorder %s22, 0
      %p157 = por %p155, %p156
      %p158 = scmp.ne.s32.totalorder %s147, %s150
      %p159 = scmp.eq.s32.totalorder %s27, 1
      %p160 = por %p158, %p159
      %p161 = scmp.ne.s32.totalorder %s150, %s151
      %p162 = scmp.eq.s32.totalorder %s27, 0
      %p163 = por %p161, %p162
      %p164 = scmp.ne.s32.totalorder %s150, %s151
      %p165 = scmp.eq.s32.totalorder %s28, 1
      %p166 = por %p164, %p165
      %p168 = scmp.ne.s32.totalorder %s151, %s167
      %p169 = scmp.eq.s32.totalorder %s28, 0
      %p170 = por %p168, %p169
      %p171 = scmp.le.s32.totalorder 1, %s22
      %p172 = scmp.lt.s32.totalorder %s22, 3
      %p173 = pnand %p171, %p172
      %p174 = pneg %p173
      // Predicated region
      $region9: #{fused_add_dwconv_bn.1} parent=5 // pred_check
        _
      $region10: #{fused_add_dwconv_bn.1} parent=5 // pred_check_branch
        %176 = sbr.rel (%p173) target = $region12
      $region11: #{fused_add_dwconv_bn.1} parent=5 // pred_region
        %s177 = ssub.s32 %s22, 1
        // Predicated region
        $region13: #{fused_add_dwconv_bn.1} parent=11 // pred_check
          %p178 = pneg %p95
        $region14: #{fused_add_dwconv_bn.1} parent=11 // pred_check_branch
          %180 = sbr.rel (%p178) target = $region16
        $region15: #{fused_add_dwconv_bn.1} parent=11 // pred_region
          %s182 = ssub.s32 16, 16
          %183 = vsyncadd [#allocation5], %s182
          %s185 = sshll.u32 %s2, 4
          %s186 = int_to_ptr.vmem [resolvable:$true] %s185
          %188 = dma.vmem_to_smem %s186, 16, [#allocation8], [#allocation5]
        $region16: #{fused_add_dwconv_bn.1} parent=11 // pred_fallthru
          _
        // Predicated region
        $region17: #{fused_add_dwconv_bn.1} parent=11 // pred_check
          %p189 = pneg %p116
        $region18: #{fused_add_dwconv_bn.1} parent=11 // pred_check_branch
          %191 = sbr.rel (%p189) target = $region20
        $region19: #{fused_add_dwconv_bn.1} parent=11 // pred_region
          %s193 = ssub.s32 16, 16
          %194 = vsyncadd [#allocation10], %s193
          %s196 = sshll.u32 %s3, 4
          %s197 = int_to_ptr.vmem [resolvable:$true] %s196
          %199 = dma.vmem_to_smem %s197, 16, [#allocation9], [#allocation10]
        $region20: #{fused_add_dwconv_bn.1} parent=11 // pred_fallthru
          _
        // Predicated region
        $region21: #{fused_add_dwconv_bn.1} parent=11 // pred_check
          %p200 = pneg %p137
        $region22: #{fused_add_dwconv_bn.1} parent=11 // pred_check_branch
          %202 = sbr.rel (%p200) target = $region24
        $region23: #{fused_add_dwconv_bn.1} parent=11 // pred_region
          %s204 = ssub.s32 16, 16
          %205 = vsyncadd [#allocation10], %s204
          %s207 = sshll.u32 %s4, 4
          %s208 = int_to_ptr.vmem [resolvable:$true] %s207
          %210 = dma.vmem_to_smem %s208, 16, [#allocation11], [#allocation10]
        $region24: #{fused_add_dwconv_bn.1} parent=11 // pred_fallthru
          _
      $region12: #{fused_add_dwconv_bn.1} parent=5 // pred_fallthru
        _
      %p211 = scmp.lt.s32.totalorder %s22, 2
      // Predicated region
      $region25: #{fused_add_dwconv_bn.1} parent=5 // pred_check
        %p212 = pneg %p211
      $region26: #{fused_add_dwconv_bn.1} parent=5 // pred_check_branch
        %214 = sbr.rel (%p212) target = $region28
      $region27: #{fused_add_dwconv_bn.1} parent=5 // pred_region
        // Predicated region
        $region29: #{fused_add_dwconv_bn.1} parent=27 // pred_check
          %p215 = pneg %p42
        $region30: #{fused_add_dwconv_bn.1} parent=27 // pred_check_branch
          %217 = sbr.rel (%p215) target = $region32
        $region31: #{fused_add_dwconv_bn.1} parent=27 // pred_region
          #allocation14 [shape = 'u32[6]{0}', space=smem, size = 0x18, scoped, tag = 'DMA stride descriptor']
          %s218 = sand.u32 %s32, 1
          %s219 = scalar_lea.sflag [#allocation3], %s218
          %s220 = sand.u32 %s32, 1
          %s221 = smul.addr %s220, 64
          %s222 = scalar_lea.vmem [#allocation2], %s221
          %s223 = smul.u32 2, %s22
          %s225 = ssub.s32 1024, 1024
          %226 = vsyncadd %s219, %s225
          %s227 = smul.addr %s223, 2
          %s228 = smul.addr %s227, 128
          %s229 = scalar_lea.hbm %s0, %s228
          %s231 = sshll.u32 1, 14
          %s232 = sxor.u32 4294967295, %s231
          %s234 = sld [smem:[#allocation0]]
          %s235 = sadd.s32 2, %s234
          %s237 = sshll.u32 7, 26
          %s238 = sxor.u32 4294967295, %s237
          %s239 = sand.u32 0, %s238
          %s240 = sshll.u32 %s235, 26
          %s241 = sor.u32 %s239, %s240
          %s242 = sshll.u32 %s222, 4
          %s243 = int_to_ptr.vmem [resolvable:$true] %s242
          %249 = sst [smem:[#allocation14]] 1024
          %s250 = scalar_lea.smem [#allocation14], 1
          %251 = sst [smem:[%s250]] 512
          %s252 = scalar_lea.smem [#allocation14], 2
          %253 = sst [smem:[%s252]] 4
          %s254 = scalar_lea.smem [#allocation14], 3
          %255 = sst [smem:[%s254]] 128
          %s256 = scalar_lea.smem [#allocation14], 4
          %257 = sst [smem:[%s256]] 128
          %s258 = scalar_lea.smem [#allocation14], 5
          %259 = sst [smem:[%s258]] 8
          %261 = dma.general %s229, 1024, %s243, %s219, [#allocation13], [#allocation14], %s241, 0
        $region32: #{fused_add_dwconv_bn.1} parent=27 // pred_fallthru
          _
        // Predicated region
        $region33: #{fused_add_dwconv_bn.1} parent=27 // pred_check
          %p262 = pneg %p68
        $region34: #{fused_add_dwconv_bn.1} parent=27 // pred_check_branch
          %264 = sbr.rel (%p262) target = $region36
        $region35: #{fused_add_dwconv_bn.1} parent=27 // pred_region
          #allocation16 [shape = 'u32[6]{0}', space=smem, size = 0x18, scoped, tag = 'DMA stride descriptor']
          %s265 = sand.u32 %s58, 1
          %s266 = scalar_lea.sflag [#allocation7], %s265
          %s267 = sand.u32 %s58, 1
          %s268 = smul.addr %s267, 64
          %s269 = scalar_lea.vmem [#allocation6], %s268
          %s270 = smul.u32 2, %s22
          %s272 = ssub.s32 1024, 1024
          %273 = vsyncadd %s266, %s272
          %s274 = smul.addr %s270, 2
          %s275 = smul.addr %s274, 128
          %s276 = scalar_lea.hbm %s1, %s275
          %s278 = sshll.u32 1, 14
          %s279 = sxor.u32 4294967295, %s278
          %s281 = sld [smem:[#allocation0]]
          %s282 = sadd.s32 2, %s281
          %s284 = sshll.u32 7, 26
          %s285 = sxor.u32 4294967295, %s284
          %s286 = sand.u32 0, %s285
          %s287 = sshll.u32 %s282, 26
          %s288 = sor.u32 %s286, %s287
          %s289 = sshll.u32 %s269, 4
          %s290 = int_to_ptr.vmem [resolvable:$true] %s289
          %296 = sst [smem:[#allocation16]] 1024
          %s297 = scalar_lea.smem [#allocation16], 1
          %298 = sst [smem:[%s297]] 512
          %s299 = scalar_lea.smem [#allocation16], 2
          %300 = sst [smem:[%s299]] 4
          %s301 = scalar_lea.smem [#allocation16], 3
          %302 = sst [smem:[%s301]] 128
          %s303 = scalar_lea.smem [#allocation16], 4
          %304 = sst [smem:[%s303]] 128
          %s305 = scalar_lea.smem [#allocation16], 5
          %306 = sst [smem:[%s305]] 8
          %308 = dma.general %s276, 1024, %s290, %s266, [#allocation15], [#allocation16], %s288, 0
        $region36: #{fused_add_dwconv_bn.1} parent=27 // pred_fallthru
          _
      $region28: #{fused_add_dwconv_bn.1} parent=5 // pred_fallthru
        _
      %p309 = scmp.le.s32.totalorder 1, %s22
      %p310 = scmp.lt.s32.totalorder %s22, 3
      %p311 = pnand %p309, %p310
      %p312 = pneg %p311
      // Predicated region
      $region37: #{fused_add_dwconv_bn.1} parent=5 // pred_check
        _
      $region38: #{fused_add_dwconv_bn.1} parent=5 // pred_check_branch
        %314 = sbr.rel (%p311) target = $region40
      $region39: #{fused_add_dwconv_bn.1} parent=5 // pred_region
        %s315 = ssub.s32 %s22, 1
        %s316 = sand.u32 %s35, 1
        %s317 = scalar_lea.sflag [#allocation3], %s316
        %s318 = sand.u32 %s35, 1
        %s319 = smul.addr %s318, 64
        %s320 = scalar_lea.vmem [#allocation2], %s319
        // Predicated region
        $region41: #{fused_add_dwconv_bn.1} parent=39 // pred_check
          %p321 = pneg %p48
        $region42: #{fused_add_dwconv_bn.1} parent=39 // pred_check_branch
          %323 = sbr.rel (%p321) target = $region44
        $region43: #{fused_add_dwconv_bn.1} parent=39 // pred_region
          %324 = dma.done %s317, 1024
        $region44: #{fused_add_dwconv_bn.1} parent=39 // pred_fallthru
          _
        %s325 = sand.u32 %s61, 1
        %s326 = scalar_lea.sflag [#allocation7], %s325
        %s327 = sand.u32 %s61, 1
        %s328 = smul.addr %s327, 64
        %s329 = scalar_lea.vmem [#allocation6], %s328
        // Predicated region
        $region45: #{fused_add_dwconv_bn.1} parent=39 // pred_check
          %p330 = pneg %p74
        $region46: #{fused_add_dwconv_bn.1} parent=39 // pred_check_branch
          %332 = sbr.rel (%p330) target = $region48
        $region47: #{fused_add_dwconv_bn.1} parent=39 // pred_region
          %333 = dma.done %s326, 1024
        $region48: #{fused_add_dwconv_bn.1} parent=39 // pred_fallthru
          _
        // Predicated region
        $region49: #{fused_add_dwconv_bn.1} parent=39 // pred_check
          %p334 = pneg %p95
        $region50: #{fused_add_dwconv_bn.1} parent=39 // pred_check_branch
          %336 = sbr.rel (%p334) target = $region52
        $region51: #{fused_add_dwconv_bn.1} parent=39 // pred_region
          %337 = dma.done [#allocation5], 16
        $region52: #{fused_add_dwconv_bn.1} parent=39 // pred_fallthru
          _
        // Predicated region
        $region53: #{fused_add_dwconv_bn.1} parent=39 // pred_check
          %p338 = pneg %p116
        $region54: #{fused_add_dwconv_bn.1} parent=39 // pred_check_branch
          %340 = sbr.rel (%p338) target = $region56
        $region55: #{fused_add_dwconv_bn.1} parent=39 // pred_region
          %341 = dma.done [#allocation10], 16
        $region56: #{fused_add_dwconv_bn.1} parent=39 // pred_fallthru
          _
        // Predicated region
        $region57: #{fused_add_dwconv_bn.1} parent=39 // pred_check
          %p342 = pneg %p137
        $region58: #{fused_add_dwconv_bn.1} parent=39 // pred_check_branch
          %344 = sbr.rel (%p342) target = $region60
        $region59: #{fused_add_dwconv_bn.1} parent=39 // pred_region
          %345 = dma.done [#allocation10], 16
        $region60: #{fused_add_dwconv_bn.1} parent=39 // pred_fallthru
          _
        %346 = sfence
        %s347 = sand.u32 %s35, 1
        %s348 = scalar_lea.sflag [#allocation3], %s347
        %s349 = sand.u32 %s35, 1
        %s350 = smul.addr %s349, 64
        %s351 = scalar_lea.vmem [#allocation2], %s350
        %p352 = pneg %p48
        %p353 = pneg %p45
        %s354 = sand.u32 %s61, 1
        %s355 = scalar_lea.sflag [#allocation7], %s354
        %s356 = sand.u32 %s61, 1
        %s357 = smul.addr %s356, 64
        %s358 = scalar_lea.vmem [#allocation6], %s357
        %p359 = pneg %p74
        %p360 = pneg %p71
        %p361 = pneg %p95
        %p362 = pneg %p92
        %p363 = pneg %p116
        %p364 = pneg %p113
        %p365 = pneg %p137
        %p366 = pneg %p134
        %p367 = pneg %p163
        %p368 = pneg %p160
        %s369 = sand.u32 %s150, 1
        %s370 = scalar_lea.sflag [#allocation4], %s369
        %s371 = sand.u32 %s150, 1
        %s372 = smul.addr %s371, 64
        %s373 = scalar_lea.vmem [#allocation12], %s372
        %s374 = smul.u32 2, %s27
        %s375 = smul.u32 2, %s27
        %s376 = smul.u32 2, %s27
        %s377 = smul.u32 %s27, 2
        %v378 = vlaneseq
        %v379 = vshrl.u32 %v378, 7
        %v380 = vadd.s32 %v379, 8
        %v381 = vlaneseq
        %v382 = vand.u32 %v381, 127
        %vm383 = vcmp.ge.s32.totalorder %v379, 1
        %vm384 = vcmp.ge.s32.totalorder %v380, 1
        %vm385 = vcmp.le.s32.totalorder %v379, 14
        %vm386 = vcmp.le.s32.totalorder %v380, 14
        %vm387 = vcmp.ge.s32.totalorder %v382, 1
        %vm388 = vcmp.le.s32.totalorder %v382, 14
        loop: start=0, step=1, limit=2
        $region61: #{fused_add_dwconv_bn.1} parent=39 // loop_pre_header
          _
        $region62: #{fused_add_dwconv_bn.1} parent=39 // loop_header
          %s390 = sphi 0, %s394
          %p391 = scmp.ge.s32.totalorder %s390, 2
        $region63: #{fused_add_dwconv_bn.1} parent=39 // loop_header_branch
          %393 = sbr.rel (%p391) target = $region67
        $region64: #{fused_add_dwconv_bn.1} parent=39 // loop_body
          %s395 = sadd.s32 %s377, %s390
          %s396 = smul.u32 %s395, 9
          %s397 = smul.u32 %s390, 16
          %s398 = scalar_lea.vmem %s320, %s397 [#allocation2]
          %v399 = vld [vmem:[%s398] sm:$0xff]
          %v400 = vld [vmem:[%s398 + $0x8] sm:$0xff]
          %v401 = vld [vmem:[%s398 + $0x20] sm:$0xff]
          %v402 = vld [vmem:[%s398 + $0x28] sm:$0xff]
          %s403 = scalar_lea.vmem %s329, %s397 [#allocation6]
          %v404 = vld [vmem:[%s403] sm:$0xff]
          %v405 = vld [vmem:[%s403 + $0x8] sm:$0xff]
          %v406 = vld [vmem:[%s403 + $0x20] sm:$0xff]
          %v407 = vld [vmem:[%s403 + $0x28] sm:$0xff]
          %v408 = vadd.f32 %v399, %v404
          %v409 = vadd.f32 %v400, %v405
          %v410 = vadd.f32 %v401, %v406
          %v411 = vadd.f32 %v402, %v407
          %s412 = sadd.s32 %s396, 4
          %s413 = sld [smem:[#allocation8 + %s412]]
          %v414 = vstv %s413
          %v415 = vmul.f32 %v408, %v414
          %v416 = vmul.f32 %v409, %v414
          %v417 = vmul.f32 %v410, %v414
          %v418 = vmul.f32 %v411, %v414
          %v419 = vrot.slane %v408, 7
          %v420 = vrot.slane %v410, 7
          %v421 = vrot.slane %v409, 7
          %v422 = vrot.slane %v411, 7
          %vm423 = vcmp.lt.s32.totalorder %v379, 1
          %v424 = vsel %vm423, %v419, %v421
          %v425 = vsel %vm423, %v420, %v422
          %v426 = vsel %vm423, %v421, %v419
          %v427 = vsel %vm423, %v422, %v420
          %v428 = vsel %vm383, %v426, 0.0
          %v429 = vsel %vm384, %v424, 0.0
          %v430 = vsel %vm383, %v427, 0.0
          %v431 = vsel %vm384, %v425, 0.0
          %vm432 = vcmask 1047680
          %433 = vrot.lane.b32.xlu0 %v428, 16
          %v434 = vpop.permute.xlu0 %433
          %v435 = vsel %vm432, %v434, %v428
          %436 = vrot.lane.b32.xlu0 %v429, 16
          %v437 = vpop.permute.xlu0 %436
          %v438 = vsel %vm432, %v437, %v429
          %439 = vrot.lane.b32.xlu0 %v430, 16
          %v440 = vpop.permute.xlu0 %439
          %v441 = vsel %vm432, %v440, %v430
          %442 = vrot.lane.b32.xlu0 %v431, 16
          %v443 = vpop.permute.xlu0 %442
          %v444 = vsel %vm432, %v443, %v431
          %445 = vrot.lane.b32.xlu0 %v435, 16
          %v446 = vpop.permute.xlu0 %445
          %447 = vrot.lane.b32.xlu0 %v438, 16
          %v448 = vpop.permute.xlu0 %447
          %449 = vrot.lane.b32.xlu0 %v441, 16
          %v450 = vpop.permute.xlu0 %449
          %451 = vrot.lane.b32.xlu0 %v444, 16
          %v452 = vpop.permute.xlu0 %451
          %v453 = vsel %vm432, %v446, %v428
          %v454 = vsel %vm432, %v448, %v429
          %v455 = vsel %vm432, %v450, %v430
          %v456 = vsel %vm432, %v452, %v431
          %461 = vrot.lane.b32.xlu0 %v453, 113
          %v462 = vpop.permute.xlu0 %461
          %463 = vrot.lane.b32.xlu0 %v454, 113
          %v464 = vpop.permute.xlu0 %463
          %465 = vrot.lane.b32.xlu0 %v455, 113
          %v466 = vpop.permute.xlu0 %465
          %467 = vrot.lane.b32.xlu0 %v456, 113
          %v468 = vpop.permute.xlu0 %467
          %v473 = vsel %vm387, %v462, 0.0
          %v474 = vsel %vm387, %v464, 0.0
          %v475 = vsel %vm387, %v466, 0.0
          %v476 = vsel %vm387, %v468, 0.0
          %s477 = sld [smem:[#allocation8 + %s396]]
          %v478 = vstv %s477
          %v479 = vmul.f32 %v473, %v478
          %v480 = vmul.f32 %v474, %v478
          %v481 = vmul.f32 %v475, %v478
          %v482 = vmul.f32 %v476, %v478
          %v483 = vadd.f32 %v415, %v479
          %v484 = vadd.f32 %v416, %v480
          %v485 = vadd.f32 %v417, %v481
          %v486 = vadd.f32 %v418, %v482
          %s487 = sadd.s32 %s396, 1
          %s488 = sld [smem:[#allocation8 + %s487]]
          %v489 = vstv %s488
          %v490 = vmul.f32 %v428, %v489
          %v491 = vmul.f32 %v429, %v489
          %v492 = vmul.f32 %v430, %v489
          %v493 = vmul.f32 %v431, %v489
          %v494 = vadd.f32 %v483, %v490
          %v495 = vadd.f32 %v484, %v491
          %v496 = vadd.f32 %v485, %v492
          %v497 = vadd.f32 %v486, %v493
          %498 = vrot.lane.b32.xlu0 %v453, 127
          %v499 = vpop.permute.xlu0 %498
          %500 = vrot.lane.b32.xlu0 %v454, 127
          %v501 = vpop.permute.xlu0 %500
          %502 = vrot.lane.b32.xlu0 %v455, 127
          %v503 = vpop.permute.xlu0 %502
          %504 = vrot.lane.b32.xlu0 %v456, 127
          %v505 = vpop.permute.xlu0 %504
          %v510 = vsel %vm388, %v499, 0.0
          %v511 = vsel %vm388, %v501, 0.0
          %v512 = vsel %vm388, %v503, 0.0
          %v513 = vsel %vm388, %v505, 0.0
          %s514 = sadd.s32 %s396, 2
          %s515 = sld [smem:[#allocation8 + %s514]]
          %v516 = vstv %s515
          %v517 = vmul.f32 %v510, %v516
          %v518 = vmul.f32 %v511, %v516
          %v519 = vmul.f32 %v512, %v516
          %v520 = vmul.f32 %v513, %v516
          %v521 = vadd.f32 %v494, %v517
          %v522 = vadd.f32 %v495, %v518
          %v523 = vadd.f32 %v496, %v519
          %v524 = vadd.f32 %v497, %v520
          %525 = vrot.lane.b32.xlu0 %v408, 16
          %v526 = vpop.permute.xlu0 %525
          %v527 = vsel %vm432, %v526, %v408
          %528 = vrot.lane.b32.xlu0 %v409, 16
          %v529 = vpop.permute.xlu0 %528
          %v530 = vsel %vm432, %v529, %v409
          %531 = vrot.lane.b32.xlu0 %v410, 16
          %v532 = vpop.permute.xlu0 %531
          %v533 = vsel %vm432, %v532, %v410
          %534 = vrot.lane.b32.xlu0 %v411, 16
          %v535 = vpop.permute.xlu0 %534
          %v536 = vsel %vm432, %v535, %v411
          %537 = vrot.lane.b32.xlu0 %v527, 16
          %v538 = vpop.permute.xlu0 %537
          %539 = vrot.lane.b32.xlu0 %v530, 16
          %v540 = vpop.permute.xlu0 %539
          %541 = vrot.lane.b32.xlu0 %v533, 16
          %v542 = vpop.permute.xlu0 %541
          %543 = vrot.lane.b32.xlu0 %v536, 16
          %v544 = vpop.permute.xlu0 %543
          %v545 = vsel %vm432, %v538, %v408
          %v546 = vsel %vm432, %v540, %v409
          %v547 = vsel %vm432, %v542, %v410
          %v548 = vsel %vm432, %v544, %v411
          %553 = vrot.lane.b32.xlu0 %v545, 113
          %v554 = vpop.permute.xlu0 %553
          %555 = vrot.lane.b32.xlu0 %v546, 113
          %v556 = vpop.permute.xlu0 %555
          %557 = vrot.lane.b32.xlu0 %v547, 113
          %v558 = vpop.permute.xlu0 %557
          %559 = vrot.lane.b32.xlu0 %v548, 113
          %v560 = vpop.permute.xlu0 %559
          %v565 = vsel %vm387, %v554, 0.0
          %v566 = vsel %vm387, %v556, 0.0
          %v567 = vsel %vm387, %v558, 0.0
          %v568 = vsel %vm387, %v560, 0.0
          %s569 = sadd.s32 %s396, 3
          %s570 = sld [smem:[#allocation8 + %s569]]
          %v571 = vstv %s570
          %v572 = vmul.f32 %v565, %v571
          %v573 = vmul.f32 %v566, %v571
          %v574 = vmul.f32 %v567, %v571
          %v575 = vmul.f32 %v568, %v571
          %v576 = vadd.f32 %v521, %v572
          %v577 = vadd.f32 %v522, %v573
          %v578 = vadd.f32 %v523, %v574
          %v579 = vadd.f32 %v524, %v575
          %580 = vrot.lane.b32.xlu0 %v545, 127
          %v581 = vpop.permute.xlu0 %580
          %582 = vrot.lane.b32.xlu0 %v546, 127
          %v583 = vpop.permute.xlu0 %582
          %584 = vrot.lane.b32.xlu0 %v547, 127
          %v585 = vpop.permute.xlu0 %584
          %586 = vrot.lane.b32.xlu0 %v548, 127
          %v587 = vpop.permute.xlu0 %586
          %v592 = vsel %vm388, %v581, 0.0
          %v593 = vsel %vm388, %v583, 0.0
          %v594 = vsel %vm388, %v585, 0.0
          %v595 = vsel %vm388, %v587, 0.0
          %s596 = sadd.s32 %s396, 5
          %s597 = sld [smem:[#allocation8 + %s596]]
          %v598 = vstv %s597
          %v599 = vmul.f32 %v592, %v598
          %v600 = vmul.f32 %v593, %v598
          %v601 = vmul.f32 %v594, %v598
          %v602 = vmul.f32 %v595, %v598
          %v603 = vadd.f32 %v576, %v599
          %v604 = vadd.f32 %v577, %v600
          %v605 = vadd.f32 %v578, %v601
          %v606 = vadd.f32 %v579, %v602
          %v607 = vrot.slane %v408, 1
          %v608 = vrot.slane %v410, 1
          %v609 = vrot.slane %v409, 1
          %v610 = vrot.slane %v411, 1
          %vm611 = vcmp.lt.s32.totalorder %v379, 7
          %v612 = vsel %vm611, %v607, %v609
          %v613 = vsel %vm611, %v608, %v610
          %v614 = vsel %vm611, %v609, %v607
          %v615 = vsel %vm611, %v610, %v608
          %v616 = vsel %vm385, %v612, 0.0
          %v617 = vsel %vm386, %v614, 0.0
          %v618 = vsel %vm385, %v613, 0.0
          %v619 = vsel %vm386, %v615, 0.0
          %620 = vrot.lane.b32.xlu0 %v616, 16
          %v621 = vpop.permute.xlu0 %620
          %v622 = vsel %vm432, %v621, %v616
          %623 = vrot.lane.b32.xlu0 %v617, 16
          %v624 = vpop.permute.xlu0 %623
          %v625 = vsel %vm432, %v624, %v617
          %626 = vrot.lane.b32.xlu0 %v618, 16
          %v627 = vpop.permute.xlu0 %626
          %v628 = vsel %vm432, %v627, %v618
          %629 = vrot.lane.b32.xlu0 %v619, 16
          %v630 = vpop.permute.xlu0 %629
          %v631 = vsel %vm432, %v630, %v619
          %632 = vrot.lane.b32.xlu0 %v622, 16
          %v633 = vpop.permute.xlu0 %632
          %634 = vrot.lane.b32.xlu0 %v625, 16
          %v635 = vpop.permute.xlu0 %634
          %636 = vrot.lane.b32.xlu0 %v628, 16
          %v637 = vpop.permute.xlu0 %636
          %638 = vrot.lane.b32.xlu0 %v631, 16
          %v639 = vpop.permute.xlu0 %638
          %v640 = vsel %vm432, %v633, %v616
          %v641 = vsel %vm432, %v635, %v617
          %v642 = vsel %vm432, %v637, %v618
          %v643 = vsel %vm432, %v639, %v619
          %648 = vrot.lane.b32.xlu0 %v640, 113
          %v649 = vpop.permute.xlu0 %648
          %650 = vrot.lane.b32.xlu0 %v641, 113
          %v651 = vpop.permute.xlu0 %650
          %652 = vrot.lane.b32.xlu0 %v642, 113
          %v653 = vpop.permute.xlu0 %652
          %654 = vrot.lane.b32.xlu0 %v643, 113
          %v655 = vpop.permute.xlu0 %654
          %v660 = vsel %vm387, %v649, 0.0
          %v661 = vsel %vm387, %v651, 0.0
          %v662 = vsel %vm387, %v653, 0.0
          %v663 = vsel %vm387, %v655, 0.0
          %s664 = sadd.s32 %s396, 6
          %s665 = sld [smem:[#allocation8 + %s664]]
          %v666 = vstv %s665
          %v667 = vmul.f32 %v660, %v666
          %v668 = vmul.f32 %v661, %v666
          %v669 = vmul.f32 %v662, %v666
          %v670 = vmul.f32 %v663, %v666
          %v671 = vadd.f32 %v603, %v667
          %v672 = vadd.f32 %v604, %v668
          %v673 = vadd.f32 %v605, %v669
          %v674 = vadd.f32 %v606, %v670
          %s675 = sadd.s32 %s396, 7
          %s676 = sld [smem:[#allocation8 + %s675]]
          %v677 = vstv %s676
          %v678 = vmul.f32 %v616, %v677
          %v679 = vmul.f32 %v617, %v677
          %v680 = vmul.f32 %v618, %v677
          %v681 = vmul.f32 %v619, %v677
          %v682 = vadd.f32 %v671, %v678
          %v683 = vadd.f32 %v672, %v679
          %v684 = vadd.f32 %v673, %v680
          %v685 = vadd.f32 %v674, %v681
          %686 = vrot.lane.b32.xlu0 %v640, 127
          %v687 = vpop.permute.xlu0 %686
          %688 = vrot.lane.b32.xlu0 %v641, 127
          %v689 = vpop.permute.xlu0 %688
          %690 = vrot.lane.b32.xlu0 %v642, 127
          %v691 = vpop.permute.xlu0 %690
          %692 = vrot.lane.b32.xlu0 %v643, 127
          %v693 = vpop.permute.xlu0 %692
          %v698 = vsel %vm388, %v687, 0.0
          %v699 = vsel %vm388, %v689, 0.0
          %v700 = vsel %vm388, %v691, 0.0
          %v701 = vsel %vm388, %v693, 0.0
          %s702 = sadd.s32 %s396, 8
          %s703 = sld [smem:[#allocation8 + %s702]]
          %v704 = vstv %s703
          %v705 = vmul.f32 %v698, %v704
          %v706 = vmul.f32 %v699, %v704
          %v707 = vmul.f32 %v700, %v704
          %v708 = vmul.f32 %v701, %v704
          %v709 = vadd.f32 %v682, %v705
          %v710 = vadd.f32 %v683, %v706
          %v711 = vadd.f32 %v684, %v707
          %v712 = vadd.f32 %v685, %v708
          %vm713 = vcmask 130048
          %v714 = vsel %vm713, %v709, 0.0
          %v715 = vsel %vm713, %v710, 0.0
          %v716 = vadd.f32 %v714, %v715
          %v717 = vsel %vm713, %v711, 0.0
          %v718 = vadd.f32 %v716, %v717
          %v719 = vsel %vm713, %v712, 0.0
          %v720 = vadd.f32 %v718, %v719
          %721 = vadd.xlane.f32.xlu0 %v720
          %v722 = vpop.xlane.xlu0 %721
          %v723 = vrot.slane %v722, 4
          %v724 = vadd.f32 %v722, %v723
          %v725 = vrot.slane %v724, 2
          %v726 = vadd.f32 %v724, %v725
          %v727 = vrot.slane %v726, 1
          %v728 = vadd.f32 %v726, %v727
          %s729 = vtos %v728
          %s730 = smul.f32 %s729, 0.001953125
          %v731 = vstv %s730
          %v732 = vsub.f32 %v709, %v731
          %v733 = vsub.f32 %v710, %v731
          %v734 = vsub.f32 %v711, %v731
          %v735 = vsub.f32 %v712, %v731
          %v736 = vmul.f32 %v732, %v732
          %v737 = vmul.f32 %v733, %v733
          %v738 = vmul.f32 %v734, %v734
          %v739 = vmul.f32 %v735, %v735
          %v740 = vsel %vm713, %v736, 0.0
          %v741 = vsel %vm713, %v737, 0.0
          %v742 = vadd.f32 %v740, %v741
          %v743 = vsel %vm713, %v738, 0.0
          %v744 = vadd.f32 %v742, %v743
          %v745 = vsel %vm713, %v739, 0.0
          %v746 = vadd.f32 %v744, %v745
          %747 = vadd.xlane.f32.xlu0 %v746
          %v748 = vpop.xlane.xlu0 %747
          %v749 = vrot.slane %v748, 4
          %v750 = vadd.f32 %v748, %v749
          %v751 = vrot.slane %v750, 2
          %v752 = vadd.f32 %v750, %v751
          %v753 = vrot.slane %v752, 1
          %v754 = vadd.f32 %v752, %v753
          %s755 = vtos %v754
          %s756 = smul.f32 %s755, 0.001953125
          %s757 = sld [smem:[#allocation9 + %s395]]
          %s758 = sadd.f32 %s756, 0.001
          %v759 = vstv %s758
          %v760 = vrsqrt.pop %v759
          %s761 = vtos %v760
          %s762 = smul.f32 %s757, %s761
          %v763 = vstv %s762
          %v764 = vmul.f32 %v732, %v763
          %v765 = vmul.f32 %v733, %v763
          %v766 = vmul.f32 %v734, %v763
          %v767 = vmul.f32 %v735, %v763
          %s768 = sld [smem:[#allocation11 + %s395]]
          %v769 = vstv %s768
          %v770 = vadd.f32 %v764, %v769
          %v771 = vadd.f32 %v765, %v769
          %v772 = vadd.f32 %v766, %v769
          %v773 = vadd.f32 %v767, %v769
          %s774 = scalar_lea.vmem %s373, %s397 [#allocation12]
          %775 = vst.msk [vmem:[%s774] sm:$0xff] %vm713, %v770
          %776 = vst.msk [vmem:[%s774 + $0x8] sm:$0xff] %vm713, %v771
          %777 = vst.msk [vmem:[%s774 + $0x20] sm:$0xff] %vm713, %v772
          %778 = vst.msk [vmem:[%s774 + $0x28] sm:$0xff] %vm713, %v773
        $region65: #{fused_add_dwconv_bn.1} parent=39 // loop_footer
          %s394 = sadd.s32 1, %s390
        $region66: #{fused_add_dwconv_bn.1} parent=39 // loop_footer_branch
          %389 = sbr.rel target = $region62
        $region67: #{fused_add_dwconv_bn.1} parent=39 // loop_exit
          _
        %s779 = sand.u32 %s150, 1
        %s780 = scalar_lea.sflag [#allocation4], %s779
        %s781 = sand.u32 %s150, 1
        %s782 = smul.addr %s781, 64
        %s783 = scalar_lea.vmem [#allocation12], %s782
        // Predicated region
        $region68: #{fused_add_dwconv_bn.1} parent=39 // pred_check
          %p784 = pneg %p160
        $region69: #{fused_add_dwconv_bn.1} parent=39 // pred_check_branch
          %786 = sbr.rel (%p784) target = $region71
        $region70: #{fused_add_dwconv_bn.1} parent=39 // pred_region
          #allocation18 [shape = 'u32[6]{0}', space=smem, size = 0x18, scoped, tag = 'DMA stride descriptor']
          %s787 = smul.u32 2, %s27
          %s789 = ssub.s32 1024, 1024
          %790 = vsyncadd %s780, %s789
          %s791 = smul.addr %s787, 2
          %s792 = smul.addr %s791, 128
          %s793 = scalar_lea.hbm %s5, %s792
          %s795 = sshll.u32 1, 14
          %s796 = sxor.u32 4294967295, %s795
          %s799 = sshll.u32 7, 18
          %s800 = sxor.u32 4294967295, %s799
          %s801 = sand.u32 0, %s800
          %s803 = sor.u32 %s801, 0
          %s805 = sshll.u32 3, 24
          %s806 = sxor.u32 4294967295, %s805
          %s807 = sand.u32 %s803, %s806
          %s809 = sor.u32 %s807, 0
          %s810 = sshll.u32 %s783, 4
          %s811 = int_to_ptr.vmem [resolvable:$true] %s810
          %817 = sst [smem:[#allocation18]] 512
          %s818 = scalar_lea.smem [#allocation18], 1
          %819 = sst [smem:[%s818]] 1024
          %s820 = scalar_lea.smem [#allocation18], 2
          %821 = sst [smem:[%s820]] 4
          %s822 = scalar_lea.smem [#allocation18], 3
          %823 = sst [smem:[%s822]] 128
          %s824 = scalar_lea.smem [#allocation18], 4
          %825 = sst [smem:[%s824]] 128
          %s826 = scalar_lea.smem [#allocation18], 5
          %827 = sst [smem:[%s826]] 8
          %829 = dma.general %s811, 1024, %s793, %s780, [#allocation17], [#allocation18], %s809, 0
        $region71: #{fused_add_dwconv_bn.1} parent=39 // pred_fallthru
          _
      $region40: #{fused_add_dwconv_bn.1} parent=5 // pred_fallthru
        _
      %p830 = scmp.le.s32.totalorder 2, %s22
      // Predicated region
      $region72: #{fused_add_dwconv_bn.1} parent=5 // pred_check
        %p831 = pneg %p830
      $region73: #{fused_add_dwconv_bn.1} parent=5 // pred_check_branch
        %833 = sbr.rel (%p831) target = $region75
      $region74: #{fused_add_dwconv_bn.1} parent=5 // pred_region
        %s834 = ssub.s32 %s22, 2
        // Predicated region
        $region76: #{fused_add_dwconv_bn.1} parent=74 // pred_check
          %p835 = pneg %p166
        $region77: #{fused_add_dwconv_bn.1} parent=74 // pred_check_branch
          %837 = sbr.rel (%p835) target = $region79
        $region78: #{fused_add_dwconv_bn.1} parent=74 // pred_region
          %s838 = sand.u32 %s151, 1
          %s839 = scalar_lea.sflag [#allocation4], %s838
          %s840 = sand.u32 %s151, 1
          %s841 = smul.addr %s840, 64
          %s842 = scalar_lea.vmem [#allocation12], %s841
          %843 = dma.done %s839, 1024
        $region79: #{fused_add_dwconv_bn.1} parent=74 // pred_fallthru
          _
      $region75: #{fused_add_dwconv_bn.1} parent=5 // pred_fallthru
        _
    $region6: #{fused_add_dwconv_bn.1} parent=1 // loop_footer
      %s26 = sadd.s32 1, %s22
    $region7: #{fused_add_dwconv_bn.1} parent=1 // loop_footer_branch
      %21 = sbr.rel target = $region3
    $region8: #{fused_add_dwconv_bn.1} parent=1 // loop_exit
      _
    %844 = vsyncpa [#allocation3], 1
    %s845 = scalar_lea.sflag [#allocation3], 1
    %846 = vsyncpa %s845, 1
    %847 = vsyncpa [#allocation7], 1
    %s848 = scalar_lea.sflag [#allocation7], 1
    %849 = vsyncpa %s848, 1
    %850 = vsyncpa [#allocation4], 1
    %s851 = scalar_lea.sflag [#allocation4], 1
    %852 = vsyncpa %s851, 1
    %853 = vsyncpa [#allocation5], 1
    %s854 = scalar_lea.sflag [#allocation5], 1
    %855 = vsyncpa %s854, 1
    %856 = vsyncpa [#allocation10], 1

</llo_original>
